<compile_context>
chip_gen: v7x
topology: tpu7x:2x2x1
jax: 0.10.0
libtpu: 0.0.40
codegen_flags: <defaults>
</compile_context>

<pallas_src>
import functools

import jax
import jax.numpy as jnp
from jax.experimental import pallas as pl
from jax.experimental.pallas import tpu as pltpu


def _round_up(x, m):
    return ((x + m - 1) // m) * m


def _round_down(x, m):
    return (x // m) * m


def _vmem_capacity_bytes():
    """Physical VMEM per TensorCore; falls back to 128 MiB (v5e/v6e)."""
    try:
        info = pltpu.get_tpu_info()
        cap = int(getattr(info, "vmem_capacity_bytes", 0) or 0)
        if cap > 0:
            return cap
    except Exception:
        pass
    return 128 << 20


def _ffn_kernel(x_ref, w1_ref, b1_ref, w2_ref, b2_ref, g_ref, beta_ref,
                o_ref, acc_ref, *, hidden_dim, eps, matmul_dtype, resident):
    """Grid = (row tiles, 4H reduction chunks); reduction axis is last.

    Weight refs are chunked as (n_chunks, Hp, tn) / (n_chunks, tn, Hp):
      resident  -> whole array lives in VMEM, chunk j indexed in-kernel
      streaming -> BlockSpec delivers only chunk j (leading dim of size 1)
    """
    j = pl.program_id(1)
    cj = j if resident else 0

    x = x_ref[...]                                   # (tm, Hp), original dtype
    xm = x.astype(matmul_dtype)                      # MXU operand only

    w1 = w1_ref[cj]                                  # (Hp, tn)
    b1 = b1_ref[cj]                                  # (1, tn)
    w2 = w2_ref[cj]                                  # (tn, Hp)

    # ---- chunk j of the H -> 4H matmul, bias + relu (f32 accumulation) -----
    h = jnp.dot(xm, w1, preferred_element_type=jnp.float32)
    h = jnp.maximum(h + b1.astype(jnp.float32), 0.0)

    # ---- chunk j's contribution to the 4H -> H matmul -----------------------
    contrib = jnp.dot(h.astype(matmul_dtype), w2,
                      preferred_element_type=jnp.float32)

    @pl.when(j == 0)
    def _first():                                    # init folded into step 0
        acc_ref[...] = contrib

    @pl.when(j != 0)
    def _accum():
        acc_ref[...] += contrib

    # ---- epilogue on the last reduction step: bias + residual + LayerNorm --
    @pl.when(j == pl.num_programs(1) - 1)
    def _epilogue():
        b2 = b2_ref[...].astype(jnp.float32)
        gamma = g_ref[...].astype(jnp.float32)
        beta = beta_ref[...].astype(jnp.float32)

        # Residual uses the full-precision x (never truncated to bf16).
        y = acc_ref[...] + b2 + x.astype(jnp.float32)          # (tm, Hp)

        # LayerNorm over the true hidden_dim lanes.  Padded lanes of y are
        # exactly 0 (zero-padded x / W2 columns / b2), so full-lane sums
        # divided by hidden_dim give the exact mean; the centered term is
        # masked before squaring so padding does not bias the variance.
        inv_h = jnp.float32(1.0 / hidden_dim)
        mean = jnp.sum(y, axis=-1, keepdims=True) * inv_h
        d = y - mean
        if hidden_dim != y.shape[-1]:
            lane = jax.lax.broadcasted_iota(jnp.int32, y.shape, dimension=1)
            d = jnp.where(lane < hidden_dim, d, 0.0)
        var = jnp.sum(d * d, axis=-1, keepdims=True) * inv_h
        inv = jax.lax.rsqrt(var + jnp.float32(eps))
        o_ref[...] = (d * inv * gamma + beta).astype(o_ref.dtype)


def feed_forward(x, w1, b1, w2, b2, gamma, beta, *, eps=1e-8,
                 block_rows=1024, block_ff=512, matmul_dtype=None,
                 weights_resident=None):
    """x: (batch, seq, H); weights in (in, out) layout. Returns (batch, seq, H).

    matmul_dtype: optionally cast W1/W2 and the MXU operands to e.g.
    jnp.bfloat16 (recommended on v5e/v6e/v7x); accumulation, residual and the
    LayerNorm epilogue stay f32.  weights_resident: None = auto (keep W1/W2
    VMEM-resident when they fit), or force True/False.
    """
    batch, seq, H = x.shape
    H4 = w1.shape[1]
    M = batch * seq

    dt = jnp.dtype(x.dtype) if matmul_dtype is None else jnp.dtype(matmul_dtype)
    x_item = jnp.dtype(x.dtype).itemsize
    w_item = dt.itemsize

    # Lane-dense padding of the hidden / intermediate dims.
    Hp = _round_up(H, 128)
    tn = min(_round_up(max(block_ff, 128), 128), _round_up(H4, 128))
    H4p = _round_up(H4, tn)

    # ---- VMEM budgeting (sublane-padded, double-buffered pipeline bufs) ----
    vmem_cap = _vmem_capacity_bytes()
    budget = int(vmem_cap * 0.75)        # headroom for Mosaic internal scratch

    def fixed_bytes(resident_, tn_):
        vec = 2 * 3 * 8 * Hp * 4                         # b2 / gamma / beta
        if resident_:
            w = 2 * (Hp * H4p + H4p * Hp) * w_item       # full W1 + W2
            b1b = 2 * 8 * H4p * 4
        else:
            w = 2 * (Hp * tn_ + tn_ * Hp) * w_item       # one chunk of each
            b1b = 2 * 8 * tn_ * 4
        return vec + w + b1b

    # x tile + output tile (double-buffered) + f32 accumulator, per row.
    per_row = 2 * Hp * x_item + 2 * Hp * x_item + Hp * 4

    def tm_cap_for(resident_, tn_):
        avail = budget - fixed_bytes(resident_, tn_)
        return _round_down(max(avail, 0) // per_row, 16)

    full_weight_bytes = 2 * (Hp * H4p + H4p * Hp) * w_item
    if weights_resident is None:
        resident = (full_weight_bytes <= budget // 2 and
                    tm_cap_for(True, tn) >= 16)
    else:
        resident = bool(weights_resident)

    if not resident:
        # Shrink the 4H chunk until a decent row tile fits the budget.
        while tn > 128 and tm_cap_for(False, tn) < min(128, _round_up(M, 16)):
            tn = max(128, tn - 128)
        H4p = _round_up(H4, tn)

    n_chunks = H4p // tn

    # Row tile: as large as the budget allows, up to block_rows (multiple of 16
    # for native bf16 sublane packing).
    tm = min(_round_up(block_rows, 16), _round_up(M, 16),
             max(16, tm_cap_for(resident, tn)))
    # Megacore (v7x): keep >= 2 row tiles when there is enough work so both
    # TensorCores get a share of the "parallel" row axis.
    if M >= 512:
        tm = min(tm, max(16, _round_up(-(-M // 2), 16)))
    Mp = _round_up(M, tm)

    # ---- host-side padding / chunked weight layout --------------------------
    x2 = jnp.pad(x.reshape(M, H), ((0, Mp - M), (0, Hp - H)))   # keep x dtype
    w1c = (jnp.pad(w1, ((0, Hp - H), (0, H4p - H4))).astype(dt)
           .reshape(Hp, n_chunks, tn).transpose(1, 0, 2))       # (nc, Hp, tn)
    w2c = (jnp.pad(w2, ((0, H4p - H4), (0, Hp - H))).astype(dt)
           .reshape(n_chunks, tn, Hp))                          # (nc, tn, Hp)
    b1c = (jnp.pad(b1, (0, H4p - H4)).astype(jnp.float32)
           .reshape(n_chunks, 1, tn))                           # (nc, 1, tn)
    b2p = jnp.pad(b2, (0, Hp - H)).astype(jnp.float32).reshape(1, Hp)
    gp = jnp.pad(gamma, (0, Hp - H)).astype(jnp.float32).reshape(1, Hp)
    bp = jnp.pad(beta, (0, Hp - H)).astype(jnp.float32).reshape(1, Hp)

    if resident:
        # Fetched once (constant block index); chunk j is sliced in-kernel.
        w1_spec = pl.BlockSpec((n_chunks, Hp, tn), lambda i, j: (0, 0, 0))
        b1_spec = pl.BlockSpec((n_chunks, 1, tn), lambda i, j: (0, 0, 0))
        w2_spec = pl.BlockSpec((n_chunks, tn, Hp), lambda i, j: (0, 0, 0))
    else:
        # Streamed chunk-by-chunk (large models that don't fit VMEM).
        w1_spec = pl.BlockSpec((1, Hp, tn), lambda i, j: (j, 0, 0))
        b1_spec = pl.BlockSpec((1, 1, tn), lambda i, j: (j, 0, 0))
        w2_spec = pl.BlockSpec((1, tn, Hp), lambda i, j: (j, 0, 0))

    needed = fixed_bytes(resident, tn) + tm * per_row
    vmem_limit = int(min(vmem_cap * 0.9, max(needed * 1.5, 48 << 20)))
    vmem_limit = int(max(vmem_limit, needed + (8 << 20)))

    grid = (Mp // tm, n_chunks)

    out = pl.pallas_call(
        functools.partial(_ffn_kernel, hidden_dim=H, eps=eps,
                          matmul_dtype=dt, resident=resident),
        out_shape=jax.ShapeDtypeStruct((Mp, Hp), x.dtype),
        grid_spec=pltpu.PrefetchScalarGridSpec(
            num_scalar_prefetch=0,
            grid=grid,
            in_specs=[
                pl.BlockSpec((tm, Hp), lambda i, j: (i, 0)),   # x row tile
                w1_spec, b1_spec, w2_spec,
                pl.BlockSpec((1, Hp), lambda i, j: (0, 0)),    # b2
                pl.BlockSpec((1, Hp), lambda i, j: (0, 0)),    # gamma
                pl.BlockSpec((1, Hp), lambda i, j: (0, 0)),    # beta
            ],
            out_specs=pl.BlockSpec((tm, Hp), lambda i, j: (i, 0)),
            scratch_shapes=[pltpu.VMEM((tm, Hp), jnp.float32)],
        ),
        compiler_params=pltpu.CompilerParams(
            dimension_semantics=("parallel", "arbitrary"),
            vmem_limit_bytes=vmem_limit,
        ),
    )(x2, w1c, b1c, w2c, b2p, gp, bp)

    return out[:M, :H].reshape(batch, seq, H)


def _reference(x, w1, b1, w2, b2, gamma, beta, eps=1e-8):
    h = jax.nn.relu(x @ w1 + b1)
    y = h @ w2 + b2 + x
    mean = jnp.mean(y, axis=-1, keepdims=True)
    var = jnp.mean((y - mean) ** 2, axis=-1, keepdims=True)
    return (y - mean) / jnp.sqrt(var + eps) * gamma + beta


def _make_inputs(hidden, batch=2, seq=8):
    key = jax.random.PRNGKey(0)
    kx, k1, kb1, k2, kb2 = jax.random.split(key, 5)
    x = jax.random.normal(kx, (batch, seq, hidden), dtype=jnp.float32)
    w1 = jax.random.normal(k1, (hidden, 4 * hidden), dtype=jnp.float32) * 0.05
    b1 = jax.random.normal(kb1, (4 * hidden,), dtype=jnp.float32) * 0.05
    w2 = jax.random.normal(k2, (4 * hidden, hidden), dtype=jnp.float32) * 0.05
    b2 = jax.random.normal(kb2, (hidden,), dtype=jnp.float32) * 0.05
    gamma = jnp.ones((hidden,), dtype=jnp.float32)
    beta = jnp.zeros((hidden,), dtype=jnp.float32)
    return x, w1, b1, w2, b2, gamma, beta


if __name__ == "__main__":
    # --- primary check: hidden=32, f32, auto (resident-weight) path ----------
    args32 = _make_inputs(32)
    ref32 = _reference(*args32)
    out = feed_forward(*args32)
    jax.block_until_ready(out)
    assert out.shape == ref32.shape
    assert jnp.allclose(out, ref32, atol=1e-5, rtol=1e-5), (
        float(jnp.max(jnp.abs(out - ref32))))

    # --- multi-chunk reduction (hidden=64 -> 2 chunks of 128) ----------------
    args64 = _make_inputs(64)
    ref64 = _reference(*args64)
    out64 = feed_forward(*args64, block_ff=128)            # resident, 2 chunks
    jax.block_until_ready(out64)
    assert jnp.allclose(out64, ref64, atol=1e-5, rtol=1e-5)

    out64s = feed_forward(*args64, block_ff=128,
                          weights_resident=False)          # streamed weights
    jax.block_until_ready(out64s)
    assert jnp.allclose(out64s, ref64, atol=1e-5, rtol=1e-5)

    # --- bf16 MXU operands; residual / LayerNorm stay f32 --------------------
    outb = feed_forward(*args32, matmul_dtype=jnp.bfloat16)
    jax.block_until_ready(outb)
    assert jnp.allclose(outb, ref32, atol=3e-2, rtol=3e-2)

    print("KERNEL_OK")
</pallas_src>

<mosaic_0001>
module attributes {stable_mosaic.version = 11 : i64} {
  func.func @_ffn_kernel(%arg0: i32, %arg1: i32, %arg2: memref<16x128xf32, #tpu.memory_space<vmem>>, %arg3: memref<1x128x128xf32, #tpu.memory_space<vmem>>, %arg4: memref<1x1x128xf32, #tpu.memory_space<vmem>>, %arg5: memref<1x128x128xf32, #tpu.memory_space<vmem>>, %arg6: memref<1x128xf32, #tpu.memory_space<vmem>>, %arg7: memref<1x128xf32, #tpu.memory_space<vmem>>, %arg8: memref<1x128xf32, #tpu.memory_space<vmem>>, %arg9: memref<16x128xf32, #tpu.memory_space<vmem>>, %arg10: memref<16x128xf32, #tpu.memory_space<vmem>>) attributes {dimension_semantics = [#tpu.dimension_semantics<parallel>, #tpu.dimension_semantics<arbitrary>], iteration_bounds = array<i64: 1, 1>, scalar_prefetch = 0 : i64, scratch_operands = 1 : i64, tpu.core_type = #tpu.core_type<tc>, window_params = [{transform_indices = @transform_0, window_bounds = array<i64: 16, 128>}, {pipeline_mode = #tpu.pipeline_mode<synchronous>, transform_indices = @transform_1, window_bounds = array<i64: 1, 128, 128>}, {pipeline_mode = #tpu.pipeline_mode<synchronous>, transform_indices = @transform_2, window_bounds = array<i64: 1, 1, 128>}, {pipeline_mode = #tpu.pipeline_mode<synchronous>, transform_indices = @transform_3, window_bounds = array<i64: 1, 128, 128>}, {pipeline_mode = #tpu.pipeline_mode<synchronous>, transform_indices = @transform_4, window_bounds = array<i64: 1, 128>}, {pipeline_mode = #tpu.pipeline_mode<synchronous>, transform_indices = @transform_5, window_bounds = array<i64: 1, 128>}, {pipeline_mode = #tpu.pipeline_mode<synchronous>, transform_indices = @transform_6, window_bounds = array<i64: 1, 128>}, {transform_indices = @transform_7, window_bounds = array<i64: 16, 128>}]} {
    %c0 = arith.constant 0 : index
    %c0_0 = arith.constant 0 : index
    %0 = vector.load %arg2[%c0, %c0_0] : memref<16x128xf32, #tpu.memory_space<vmem>>, vector<16x128xf32>
    %1 = arith.index_cast %arg1 : i32 to index
    %c0_1 = arith.constant 0 : index
    %c0_2 = arith.constant 0 : index
    %2 = vector.load %arg3[%1, %c0_1, %c0_2] : memref<1x128x128xf32, #tpu.memory_space<vmem>>, vector<1x128x128xf32>
    %3 = vector.shape_cast %2 : vector<1x128x128xf32> to vector<128x128xf32>
    %4 = arith.index_cast %arg1 : i32 to index
    %c0_3 = arith.constant 0 : index
    %c0_4 = arith.constant 0 : index
    %5 = vector.load %arg4[%4, %c0_3, %c0_4] : memref<1x1x128xf32, #tpu.memory_space<vmem>>, vector<1x1x128xf32>
    %6 = vector.shape_cast %5 : vector<1x1x128xf32> to vector<1x128xf32>
    %7 = arith.index_cast %arg1 : i32 to index
    %c0_5 = arith.constant 0 : index
    %c0_6 = arith.constant 0 : index
    %8 = vector.load %arg5[%7, %c0_5, %c0_6] : memref<1x128x128xf32, #tpu.memory_space<vmem>>, vector<1x128x128xf32>
    %9 = vector.shape_cast %8 : vector<1x128x128xf32> to vector<128x128xf32>
    %cst = arith.constant dense<0.000000e+00> : vector<16x128xf32>
    %10 = tpu.matmul %0, %3, %cst {dimension_numbers = #tpu.dot_dimension_numbers<[1], [0], [0], [1], [0, 0, 1, 1], [], []>} : vector<16x128xf32>, vector<128x128xf32>, vector<16x128xf32> -> vector<16x128xf32>
    %11 = vector.broadcast %6 : vector<1x128xf32> to vector<16x128xf32>
    %12 = arith.addf %10, %11 : vector<16x128xf32>
    %cst_7 = arith.constant 0.000000e+00 : f32
    %13 = vector.broadcast %cst_7 : f32 to vector<16x128xf32>
    %14 = arith.maximumf %12, %13 : vector<16x128xf32>
    %cst_8 = arith.constant dense<0.000000e+00> : vector<16x128xf32>
    %15 = tpu.matmul %14, %9, %cst_8 {dimension_numbers = #tpu.dot_dimension_numbers<[1], [0], [0], [1], [0, 0, 1, 1], [], []>} : vector<16x128xf32>, vector<128x128xf32>, vector<16x128xf32> -> vector<16x128xf32>
    %c0_i32 = arith.constant 0 : i32
    %16 = arith.cmpi eq, %arg1, %c0_i32 : i32
    %17 = arith.extui %16 : i1 to i32
    %c0_i32_9 = arith.constant 0 : i32
    %18 = arith.cmpi ne, %17, %c0_i32_9 : i32
    scf.if %18 {
      %c0_14 = arith.constant 0 : index
      %c0_15 = arith.constant 0 : index
      %25 = vector.load %arg10[%c0_14, %c0_15] : memref<16x128xf32, #tpu.memory_space<vmem>>, vector<16x128xf32>
      tpu.vector_store %arg10[%c0_14, %c0_15], %15 {strides = array<i32>} : memref<16x128xf32, #tpu.memory_space<vmem>>, vector<16x128xf32>,
    } else {
    }
    %c0_i32_10 = arith.constant 0 : i32
    %19 = arith.cmpi ne, %arg1, %c0_i32_10 : i32
    %20 = arith.extui %19 : i1 to i32
    %c0_i32_11 = arith.constant 0 : i32
    %21 = arith.cmpi ne, %20, %c0_i32_11 : i32
    scf.if %21 {
      %c0_14 = arith.constant 0 : index
      %c0_15 = arith.constant 0 : index
      %25 = vector.load %arg10[%c0_14, %c0_15] : memref<16x128xf32, #tpu.memory_space<vmem>>, vector<16x128xf32>
      %26 = arith.addf %25, %15 : vector<16x128xf32>
      %c0_16 = arith.constant 0 : index
      %c0_17 = arith.constant 0 : index
      %27 = vector.load %arg10[%c0_16, %c0_17] : memref<16x128xf32, #tpu.memory_space<vmem>>, vector<16x128xf32>
      tpu.vector_store %arg10[%c0_16, %c0_17], %26 {strides = array<i32>} : memref<16x128xf32, #tpu.memory_space<vmem>>, vector<16x128xf32>,
    } else {
    }
    %c0_i32_12 = arith.constant 0 : i32
    %22 = arith.cmpi eq, %arg1, %c0_i32_12 : i32
    %23 = arith.extui %22 : i1 to i32
    %c0_i32_13 = arith.constant 0 : i32
    %24 = arith.cmpi ne, %23, %c0_i32_13 : i32
    scf.if %24 {
      %c0_14 = arith.constant 0 : index
      %c0_15 = arith.constant 0 : index
      %25 = vector.load %arg6[%c0_14, %c0_15] : memref<1x128xf32, #tpu.memory_space<vmem>>, vector<1x128xf32>
      %c0_16 = arith.constant 0 : index
      %c0_17 = arith.constant 0 : index
      %26 = vector.load %arg7[%c0_16, %c0_17] : memref<1x128xf32, #tpu.memory_space<vmem>>, vector<1x128xf32>
      %c0_18 = arith.constant 0 : index
      %c0_19 = arith.constant 0 : index
      %27 = vector.load %arg8[%c0_18, %c0_19] : memref<1x128xf32, #tpu.memory_space<vmem>>, vector<1x128xf32>
      %c0_20 = arith.constant 0 : index
      %c0_21 = arith.constant 0 : index
      %28 = vector.load %arg10[%c0_20, %c0_21] : memref<16x128xf32, #tpu.memory_space<vmem>>, vector<16x128xf32>
      %29 = vector.broadcast %25 : vector<1x128xf32> to vector<16x128xf32>
      %30 = arith.addf %28, %29 : vector<16x128xf32>
      %31 = arith.addf %30, %0 : vector<16x128xf32>
      %cst_22 = arith.constant dense<0.000000e+00> : vector<16xf32>
      %32 = vector.multi_reduction <add>, %31, %cst_22 [1] : vector<16x128xf32> to vector<16xf32>
      %33 = vector.shape_cast %32 : vector<16xf32> to vector<16x1xf32>
      %cst_23 = arith.constant 3.125000e-02 : f32
      %34 = vector.broadcast %cst_23 : f32 to vector<16x1xf32>
      %35 = arith.mulf %33, %34 : vector<16x1xf32>
      %36 = vector.broadcast %35 : vector<16x1xf32> to vector<16x128xf32>
      %37 = arith.subf %31, %36 : vector<16x128xf32>
      %38 = tpu.iota {dimensions = array<i32: 1>} : vector<16x128xi32>
      %c32_i32 = arith.constant 32 : i32
      %39 = vector.broadcast %c32_i32 : i32 to vector<16x128xi32>
      %40 = arith.cmpi slt, %38, %39 : vector<16x128xi32>
      %cst_24 = arith.constant 0.000000e+00 : f32
      %41 = vector.broadcast %cst_24 : f32 to vector<16x128xf32>
      %42 = arith.select %40, %37, %41 : vector<16x128xi1>, vector<16x128xf32>
      %43 = arith.mulf %42, %42 : vector<16x128xf32>
      %cst_25 = arith.constant dense<0.000000e+00> : vector<16xf32>
      %44 = vector.multi_reduction <add>, %43, %cst_25 [1] : vector<16x128xf32> to vector<16xf32>
      %45 = vector.shape_cast %44 : vector<16xf32> to vector<16x1xf32>
      %cst_26 = arith.constant 3.125000e-02 : f32
      %46 = vector.broadcast %cst_26 : f32 to vector<16x1xf32>
      %47 = arith.mulf %45, %46 : vector<16x1xf32>
      %cst_27 = arith.constant 9.99999993E-9 : f32
      %48 = vector.broadcast %cst_27 : f32 to vector<16x1xf32>
      %49 = arith.addf %47, %48 : vector<16x1xf32>
      %50 = math.rsqrt %49 : vector<16x1xf32>
      %51 = vector.broadcast %50 : vector<16x1xf32> to vector<16x128xf32>
      %52 = arith.mulf %42, %51 : vector<16x128xf32>
      %53 = vector.broadcast %26 : vector<1x128xf32> to vector<16x128xf32>
      %54 = arith.mulf %52, %53 : vector<16x128xf32>
      %55 = vector.broadcast %27 : vector<1x128xf32> to vector<16x128xf32>
      %56 = arith.addf %54, %55 : vector<16x128xf32>
      %c0_28 = arith.constant 0 : index
      %c0_29 = arith.constant 0 : index
      %57 = vector.load %arg9[%c0_28, %c0_29] : memref<16x128xf32, #tpu.memory_space<vmem>>, vector<16x128xf32>
      tpu.vector_store %arg9[%c0_28, %c0_29], %56 {strides = array<i32>} : memref<16x128xf32, #tpu.memory_space<vmem>>, vector<16x128xf32>,
    } else {
    }
    return
  }
  func.func @transform_0(%arg0: i32, %arg1: i32) -> (i32, i32) {
    %c0_i32 = arith.constant 0 : i32
    %c0_i32_0 = arith.constant 0 : i32
    return %arg0, %c0_i32 : i32, i32
  }
  func.func @transform_1(%arg0: i32, %arg1: i32) -> (i32, i32, i32) {
    %c0_i32 = arith.constant 0 : i32
    %c0_i32_0 = arith.constant 0 : i32
    %c0_i32_1 = arith.constant 0 : i32
    %c0_i32_2 = arith.constant 0 : i32
    return %c0_i32, %c0_i32_0, %c0_i32_1 : i32, i32, i32
  }
  func.func @transform_2(%arg0: i32, %arg1: i32) -> (i32, i32, i32) {
    %c0_i32 = arith.constant 0 : i32
    %c0_i32_0 = arith.constant 0 : i32
    %c0_i32_1 = arith.constant 0 : i32
    %c0_i32_2 = arith.constant 0 : i32
    return %c0_i32, %c0_i32_0, %c0_i32_1 : i32, i32, i32
  }
  func.func @transform_3(%arg0: i32, %arg1: i32) -> (i32, i32, i32) {
    %c0_i32 = arith.constant 0 : i32
    %c0_i32_0 = arith.constant 0 : i32
    %c0_i32_1 = arith.constant 0 : i32
    %c0_i32_2 = arith.constant 0 : i32
    return %c0_i32, %c0_i32_0, %c0_i32_1 : i32, i32, i32
  }
  func.func @transform_4(%arg0: i32, %arg1: i32) -> (i32, i32) {
    %c0_i32 = arith.constant 0 : i32
    %c0_i32_0 = arith.constant 0 : i32
    %c0_i32_1 = arith.constant 0 : i32
    return %c0_i32, %c0_i32_0 : i32, i32
  }
  func.func @transform_5(%arg0: i32, %arg1: i32) -> (i32, i32) {
    %c0_i32 = arith.constant 0 : i32
    %c0_i32_0 = arith.constant 0 : i32
    %c0_i32_1 = arith.constant 0 : i32
    return %c0_i32, %c0_i32_0 : i32, i32
  }
  func.func @transform_6(%arg0: i32, %arg1: i32) -> (i32, i32) {
    %c0_i32 = arith.constant 0 : i32
    %c0_i32_0 = arith.constant 0 : i32
    %c0_i32_1 = arith.constant 0 : i32
    return %c0_i32, %c0_i32_0 : i32, i32
  }
  func.func @transform_7(%arg0: i32, %arg1: i32) -> (i32, i32) {
    %c0_i32 = arith.constant 0 : i32
    %c0_i32_0 = arith.constant 0 : i32
    return %arg0, %c0_i32 : i32, i32
  }
}

</mosaic_0001>

<llo_original>
// kernel: tpu_custom_call.1
$region0: #{tpu_custom_call.1}
  #allocation0 [shape = 'u32[]', space=smem, size = 0x4, offset = 0x4, fixed_abs, tag = 'smem constant byte address 0x4 - core index']
  #allocation1 [shape = 'u32[144,128]{1,0:T(1,128)}', space=vmem, size = 0x12000, scoped, tag = 'internal scratch']
  #allocation2 [shape = 'f32[16,128]{1,0:T(8,128)}', space=vmem, size = 0x2000, scoped, tag = 'scratch operand']
  %s0 = inlined_call_operand.hbm [shape: f32[16,128], index: 0, kind: input, shape index: {}]
  %s1 = inlined_call_operand.hbm [shape: f32[1,128,128], index: 1, kind: input, shape index: {}]
  %s2 = inlined_call_operand.vmem [shape: f32[1,1,128], index: 2, kind: input, shape index: {}]
  %s3 = inlined_call_operand.hbm [shape: f32[1,128,128], index: 3, kind: input, shape index: {}]
  %s4 = inlined_call_operand.vmem [shape: f32[1,128], index: 4, kind: input, shape index: {}]
  %s5 = inlined_call_operand.vmem [shape: f32[1,128], index: 5, kind: input, shape index: {}]
  %s6 = inlined_call_operand.vmem [shape: f32[1,128], index: 6, kind: input, shape index: {}]
  %s7 = inlined_call_operand.hbm [shape: f32[16,128], index: 7, kind: output, shape index: {}]
  %s8 = sld [smem:[#allocation0]]
  $region62: #{tpu_custom_call.1} parent=0
    _
  %s10 = ssub.s32 1, %s8
  %s11 = scalar_select 0, %s10, %s8
  $region1: #{tpu_custom_call.1} parent=0
    #allocation3 [shape = 'u8[8192]{0}', space=vmem, size = 0x2000, scoped, tag = 'input window, operand 0, single buffered']
    #allocation4 [shape = 's32[1]{0}', space=sflag, size = 0x4, scoped, tag = 'scoped memory for tpu_custom_call.1']
    #allocation5 [shape = 's32[1]{0}', space=sflag, size = 0x4, scoped, tag = 'scoped memory for tpu_custom_call.1']
    #allocation6 [shape = 'u8[65536]{0}', space=vmem, size = 0x10000, scoped, tag = 'input window, operand 1, single buffered']
    #allocation7 [shape = 's32[1]{0}', space=sflag, size = 0x4, scoped, tag = 'scoped memory for tpu_custom_call.1']
    #allocation8 [shape = 'u8[65536]{0}', space=vmem, size = 0x10000, scoped, tag = 'input window, operand 3, single buffered']
    #allocation9 [shape = 'u8[8192]{0}', space=vmem, size = 0x2000, scoped, tag = 'output window, operand 0, single buffered']
    %12 = vsyncpa [#allocation4], 0
    %13 = vsyncpa [#allocation7], 0
    %14 = vsyncpa [#allocation5], 0
    // Predicated region
    $region2: #{tpu_custom_call.1} parent=1 // pred_check
      _
    $region3: #{tpu_custom_call.1} parent=1 // pred_check_branch
      %16 = sbr.rel (0) target = $region5
    $region4: #{tpu_custom_call.1} parent=1 // pred_region
      %s18 = ssub.s32 256, 256
      %19 = vsyncadd [#allocation4], %s18
      %s20 = sshll.u32 [#allocation3], 4
      %s21 = int_to_ptr.vmem [resolvable:$true] %s20
      %26 = dma.hbm_to_vmem [thread:$0]  %s0, 256, %s21, [#allocation4], 128, 128, 8
    $region5: #{tpu_custom_call.1} parent=1 // pred_fallthru
      _
    // Predicated region
    $region6: #{tpu_custom_call.1} parent=1 // pred_check
      _
    $region7: #{tpu_custom_call.1} parent=1 // pred_check_branch
      %28 = sbr.rel (0) target = $region9
    $region8: #{tpu_custom_call.1} parent=1 // pred_region
      %s30 = ssub.s32 2048, 2048
      %31 = vsyncadd [#allocation7], %s30
      %s32 = sshll.u32 [#allocation6], 4
      %s33 = int_to_ptr.vmem [resolvable:$true] %s32
      %38 = dma.hbm_to_vmem [thread:$0]  %s1, 2048, %s33, [#allocation7], 128, 128, 8
    $region9: #{tpu_custom_call.1} parent=1 // pred_fallthru
      _
    // Predicated region
    $region10: #{tpu_custom_call.1} parent=1 // pred_check
      _
    $region11: #{tpu_custom_call.1} parent=1 // pred_check_branch
      %40 = sbr.rel (0) target = $region13
    $region12: #{tpu_custom_call.1} parent=1 // pred_region
      _
    $region13: #{tpu_custom_call.1} parent=1 // pred_fallthru
      _
    // Predicated region
    $region14: #{tpu_custom_call.1} parent=1 // pred_check
      _
    $region15: #{tpu_custom_call.1} parent=1 // pred_check_branch
      %42 = sbr.rel (0) target = $region17
    $region16: #{tpu_custom_call.1} parent=1 // pred_region
      %s44 = ssub.s32 2048, 2048
      %45 = vsyncadd [#allocation7], %s44
      %s46 = sshll.u32 [#allocation8], 4
      %s47 = int_to_ptr.vmem [resolvable:$true] %s46
      %52 = dma.hbm_to_vmem [thread:$0]  %s3, 2048, %s47, [#allocation7], 128, 128, 8
    $region17: #{tpu_custom_call.1} parent=1 // pred_fallthru
      _
    // Predicated region
    $region18: #{tpu_custom_call.1} parent=1 // pred_check
      _
    $region19: #{tpu_custom_call.1} parent=1 // pred_check_branch
      %54 = sbr.rel (0) target = $region21
    $region20: #{tpu_custom_call.1} parent=1 // pred_region
      _
    $region21: #{tpu_custom_call.1} parent=1 // pred_fallthru
      _
    // Predicated region
    $region22: #{tpu_custom_call.1} parent=1 // pred_check
      _
    $region23: #{tpu_custom_call.1} parent=1 // pred_check_branch
      %56 = sbr.rel (0) target = $region25
    $region24: #{tpu_custom_call.1} parent=1 // pred_region
      _
    $region25: #{tpu_custom_call.1} parent=1 // pred_fallthru
      _
    // Predicated region
    $region26: #{tpu_custom_call.1} parent=1 // pred_check
      _
    $region27: #{tpu_custom_call.1} parent=1 // pred_check_branch
      %58 = sbr.rel (0) target = $region29
    $region28: #{tpu_custom_call.1} parent=1 // pred_region
      _
    $region29: #{tpu_custom_call.1} parent=1 // pred_fallthru
      _
    // Predicated region
    $region30: #{tpu_custom_call.1} parent=1 // pred_check
      _
    $region31: #{tpu_custom_call.1} parent=1 // pred_check_branch
      %60 = sbr.rel (0) target = $region33
    $region32: #{tpu_custom_call.1} parent=1 // pred_region
      %61 = dma.done [#allocation4], 256
    $region33: #{tpu_custom_call.1} parent=1 // pred_fallthru
      _
    // Predicated region
    $region34: #{tpu_custom_call.1} parent=1 // pred_check
      _
    $region35: #{tpu_custom_call.1} parent=1 // pred_check_branch
      %63 = sbr.rel (0) target = $region37
    $region36: #{tpu_custom_call.1} parent=1 // pred_region
      %64 = dma.done [#allocation7], 2048
    $region37: #{tpu_custom_call.1} parent=1 // pred_fallthru
      _
    // Predicated region
    $region38: #{tpu_custom_call.1} parent=1 // pred_check
      _
    $region39: #{tpu_custom_call.1} parent=1 // pred_check_branch
      %66 = sbr.rel (0) target = $region41
    $region40: #{tpu_custom_call.1} parent=1 // pred_region
      %67 = dma.done [#allocation7], 2048
    $region41: #{tpu_custom_call.1} parent=1 // pred_fallthru
      _
    %v68 = vld [vmem:[#allocation3] sm:$0xff]
    %v69 = vld [vmem:[#allocation3 + $0x8] sm:$0xff]
    %s70 = smul.u32 0, 128
    %s71 = scalar_lea.vmem [#allocation6], %s70
    %v72 = vld [vmem:[%s71] sm:$0xff]
    %v73 = vld [vmem:[%s71 + $0x8] sm:$0xff]
    %v74 = vld [vmem:[%s71 + $0x10] sm:$0xff]
    %v75 = vld [vmem:[%s71 + $0x18] sm:$0xff]
    %v76 = vld [vmem:[%s71 + $0x20] sm:$0xff]
    %v77 = vld [vmem:[%s71 + $0x28] sm:$0xff]
    %v78 = vld [vmem:[%s71 + $0x30] sm:$0xff]
    %v79 = vld [vmem:[%s71 + $0x38] sm:$0xff]
    %v80 = vld [vmem:[%s71 + $0x40] sm:$0xff]
    %v81 = vld [vmem:[%s71 + $0x48] sm:$0xff]
    %v82 = vld [vmem:[%s71 + $0x50] sm:$0xff]
    %v83 = vld [vmem:[%s71 + $0x58] sm:$0xff]
    %v84 = vld [vmem:[%s71 + $0x60] sm:$0xff]
    %v85 = vld [vmem:[%s71 + $0x68] sm:$0xff]
    %v86 = vld [vmem:[%s71 + $0x70] sm:$0xff]
    %v87 = vld [vmem:[%s71 + $0x78] sm:$0xff]
    %v88 = vld [vmem:[%s2] sm:$0x1]
    %s89 = scalar_lea.vmem [#allocation8], %s70
    %v90 = vld [vmem:[%s89] sm:$0xff]
    %v91 = vld [vmem:[%s89 + $0x8] sm:$0xff]
    %v92 = vld [vmem:[%s89 + $0x10] sm:$0xff]
    %v93 = vld [vmem:[%s89 + $0x18] sm:$0xff]
    %v94 = vld [vmem:[%s89 + $0x20] sm:$0xff]
    %v95 = vld [vmem:[%s89 + $0x28] sm:$0xff]
    %v96 = vld [vmem:[%s89 + $0x30] sm:$0xff]
    %v97 = vld [vmem:[%s89 + $0x38] sm:$0xff]
    %v98 = vld [vmem:[%s89 + $0x40] sm:$0xff]
    %v99 = vld [vmem:[%s89 + $0x48] sm:$0xff]
    %v100 = vld [vmem:[%s89 + $0x50] sm:$0xff]
    %v101 = vld [vmem:[%s89 + $0x58] sm:$0xff]
    %v102 = vld [vmem:[%s89 + $0x60] sm:$0xff]
    %v103 = vld [vmem:[%s89 + $0x68] sm:$0xff]
    %v104 = vld [vmem:[%s89 + $0x70] sm:$0xff]
    %v105 = vld [vmem:[%s89 + $0x78] sm:$0xff]
    %v107 = vlaneseq
    %v108 = vshrl.u32 %v107, 7
    %v109 = vsub.s32 0, %v108
    %v110 = vrot.slane %v88, %v109
    %112 = vmatprep.subr.mxu0 0.0
    %113 = vmatpush1.msra.mxu0 %v72
    %114 = vmatprep.subr.mxu0 0.0
    %115 = vmatpush1.msra.mxu0 %v73
    %116 = vmatprep.subr.mxu0 0.0
    %117 = vmatpush1.msra.mxu0 %v74
    %118 = vmatprep.subr.mxu0 0.0
    %119 = vmatpush1.msra.mxu0 %v75
    %120 = vmatprep.subr.mxu0 0.0
    %121 = vmatpush1.msra.mxu0 %v76
    %122 = vmatprep.subr.mxu0 0.0
    %123 = vmatpush1.msra.mxu0 %v77
    %124 = vmatprep.subr.mxu0 0.0
    %125 = vmatpush1.msra.mxu0 %v78
    %126 = vmatprep.subr.mxu0 0.0
    %127 = vmatpush1.msra.mxu0 %v79
    %128 = vmatprep.subr.mxu0 0.0
    %129 = vmatpush1.msra.mxu0 %v80
    %130 = vmatprep.subr.mxu0 0.0
    %131 = vmatpush1.msra.mxu0 %v81
    %132 = vmatprep.subr.mxu0 0.0
    %133 = vmatpush1.msra.mxu0 %v82
    %134 = vmatprep.subr.mxu0 0.0
    %135 = vmatpush1.msra.mxu0 %v83
    %136 = vmatprep.subr.mxu0 0.0
    %137 = vmatpush1.msra.mxu0 %v84
    %138 = vmatprep.subr.mxu0 0.0
    %139 = vmatpush1.msra.mxu0 %v85
    %140 = vmatprep.subr.mxu0 0.0
    %141 = vmatpush1.msra.mxu0 %v86
    %142 = vmatprep.subr.mxu0 0.0
    %143 = vmatpush1.msra.mxu0 %v87
    %144 = vmatprep.subr.mxu0 0.0
    %145 = vmatpush1.msra.mxu0 0.0
    %146 = vmatprep.subr.mxu0 0.0
    %147 = vmatpush1.msra.mxu0 0.0
    %148 = vmatprep.subr.mxu0 0.0
    %149 = vmatpush1.msra.mxu0 0.0
    %150 = vmatprep.subr.mxu0 0.0
    %151 = vmatpush1.msra.mxu0 0.0
    %152 = vmatprep.subr.mxu0 0.0
    %153 = vmatpush1.msra.mxu0 0.0
    %154 = vmatprep.subr.mxu0 0.0
    %155 = vmatpush1.msra.mxu0 0.0
    %156 = vmatprep.subr.mxu0 0.0
    %157 = vmatpush1.msra.mxu0 0.0
    %158 = vmatprep.subr.mxu0 0.0
    %159 = vmatpush1.msra.mxu0 0.0
    %160 = vmatprep.subr.mxu0 0.0
    %161 = vmatpush1.msra.mxu0 0.0
    %162 = vmatprep.subr.mxu0 0.0
    %163 = vmatpush1.msra.mxu0 0.0
    %164 = vmatprep.subr.mxu0 0.0
    %165 = vmatpush1.msra.mxu0 0.0
    %166 = vmatprep.subr.mxu0 0.0
    %167 = vmatpush1.msra.mxu0 0.0
    %168 = vmatprep.subr.mxu0 0.0
    %169 = vmatpush1.msra.mxu0 0.0
    %170 = vmatprep.subr.mxu0 0.0
    %171 = vmatpush1.msra.mxu0 0.0
    %172 = vmatprep.subr.mxu0 0.0
    %173 = vmatpush1.msra.mxu0 0.0
    %174 = vmatprep.subr.mxu0 0.0
    %175 = vmatpush1.msra.mxu0 0.0
    %176 = vmatprep.mubr.f32.mxu0 0.0
    %177 = vmatmul.mubr.f32.gmra.mrb[0].mxu0 %v68
    %v178 = vpop.f32.mrb[0].mxu0
    %v179 = vadd.f32 %v110, %v178
    %v180 = vpop.f32.mrb[0].mxu0
    %181 = vmatprep.mubr.f32.mxu0 0.0
    %182 = vmatmul.mubr.f32.gmra.mrb[0].mxu0 %v69
    %v183 = vpop.f32.mrb[0].mxu0
    %v184 = vadd.f32 %v110, %v183
    %v185 = vpop.f32.mrb[0].mxu0
    %186 = vdwg.mxu0
    %v187 = vmax.f32 %v179, 0.0
    %v188 = vmax.f32 %v184, 0.0
    %189 = vmatprep.subr.mxu0 0.0
    %190 = vmatpush1.msra.mxu0 %v90
    %191 = vmatprep.subr.mxu0 0.0
    %192 = vmatpush1.msra.mxu0 %v91
    %193 = vmatprep.subr.mxu0 0.0
    %194 = vmatpush1.msra.mxu0 %v92
    %195 = vmatprep.subr.mxu0 0.0
    %196 = vmatpush1.msra.mxu0 %v93
    %197 = vmatprep.subr.mxu0 0.0
    %198 = vmatpush1.msra.mxu0 %v94
    %199 = vmatprep.subr.mxu0 0.0
    %200 = vmatpush1.msra.mxu0 %v95
    %201 = vmatprep.subr.mxu0 0.0
    %202 = vmatpush1.msra.mxu0 %v96
    %203 = vmatprep.subr.mxu0 0.0
    %204 = vmatpush1.msra.mxu0 %v97
    %205 = vmatprep.subr.mxu0 0.0
    %206 = vmatpush1.msra.mxu0 %v98
    %207 = vmatprep.subr.mxu0 0.0
    %208 = vmatpush1.msra.mxu0 %v99
    %209 = vmatprep.subr.mxu0 0.0
    %210 = vmatpush1.msra.mxu0 %v100
    %211 = vmatprep.subr.mxu0 0.0
    %212 = vmatpush1.msra.mxu0 %v101
    %213 = vmatprep.subr.mxu0 0.0
    %214 = vmatpush1.msra.mxu0 %v102
    %215 = vmatprep.subr.mxu0 0.0
    %216 = vmatpush1.msra.mxu0 %v103
    %217 = vmatprep.subr.mxu0 0.0
    %218 = vmatpush1.msra.mxu0 %v104
    %219 = vmatprep.subr.mxu0 0.0
    %220 = vmatpush1.msra.mxu0 %v105
    %221 = vmatprep.subr.mxu0 0.0
    %222 = vmatpush1.msra.mxu0 0.0
    %223 = vmatprep.subr.mxu0 0.0
    %224 = vmatpush1.msra.mxu0 0.0
    %225 = vmatprep.subr.mxu0 0.0
    %226 = vmatpush1.msra.mxu0 0.0
    %227 = vmatprep.subr.mxu0 0.0
    %228 = vmatpush1.msra.mxu0 0.0
    %229 = vmatprep.subr.mxu0 0.0
    %230 = vmatpush1.msra.mxu0 0.0
    %231 = vmatprep.subr.mxu0 0.0
    %232 = vmatpush1.msra.mxu0 0.0
    %233 = vmatprep.subr.mxu0 0.0
    %234 = vmatpush1.msra.mxu0 0.0
    %235 = vmatprep.subr.mxu0 0.0
    %236 = vmatpush1.msra.mxu0 0.0
    %237 = vmatprep.subr.mxu0 0.0
    %238 = vmatpush1.msra.mxu0 0.0
    %239 = vmatprep.subr.mxu0 0.0
    %240 = vmatpush1.msra.mxu0 0.0
    %241 = vmatprep.subr.mxu0 0.0
    %242 = vmatpush1.msra.mxu0 0.0
    %243 = vmatprep.subr.mxu0 0.0
    %244 = vmatpush1.msra.mxu0 0.0
    %245 = vmatprep.subr.mxu0 0.0
    %246 = vmatpush1.msra.mxu0 0.0
    %247 = vmatprep.subr.mxu0 0.0
    %248 = vmatpush1.msra.mxu0 0.0
    %249 = vmatprep.subr.mxu0 0.0
    %250 = vmatpush1.msra.mxu0 0.0
    %251 = vmatprep.subr.mxu0 0.0
    %252 = vmatpush1.msra.mxu0 0.0
    %253 = vmatprep.mubr.f32.mxu0 0.0
    %254 = vmatmul.mubr.f32.gmra.mrb[0].mxu0 %v187
    %v255 = vpop.f32.mrb[0].mxu0
    %v256 = vadd.f32 0.0, %v255
    %v257 = vpop.f32.mrb[0].mxu0
    %258 = vmatprep.mubr.f32.mxu0 0.0
    %259 = vmatmul.mubr.f32.gmra.mrb[0].mxu0 %v188
    %v260 = vpop.f32.mrb[0].mxu0
    %v261 = vadd.f32 0.0, %v260
    %v262 = vpop.f32.mrb[0].mxu0
    %263 = vdwg.mxu0
    %p264 = scmp.eq.s32.totalorder 0, 0
    // Predicated region
    $region42: #{tpu_custom_call.1} parent=1 // pred_check
      %p265 = pneg %p264
    $region43: #{tpu_custom_call.1} parent=1 // pred_check_branch
      %267 = sbr.rel (%p265) target = $region45
    $region44: #{tpu_custom_call.1} parent=1 // pred_region
      %268 = vst [vmem:[#allocation2] sm:$0xff] %v256
      %269 = vst [vmem:[#allocation2 + $0x8] sm:$0xff] %v261
    $region45: #{tpu_custom_call.1} parent=1 // pred_fallthru
      _
    %p270 = scmp.ne.s32.totalorder 0, 0
    // Predicated region
    $region46: #{tpu_custom_call.1} parent=1 // pred_check
      %p271 = pneg %p270
    $region47: #{tpu_custom_call.1} parent=1 // pred_check_branch
      %273 = sbr.rel (%p271) target = $region49
    $region48: #{tpu_custom_call.1} parent=1 // pred_region
      %v274 = vld [vmem:[#allocation2] sm:$0xff]
      %v275 = vld [vmem:[#allocation2 + $0x8] sm:$0xff]
      %v276 = vadd.f32 %v274, %v256
      %v277 = vadd.f32 %v275, %v261
      %278 = vst [vmem:[#allocation2] sm:$0xff] %v276
      %279 = vst [vmem:[#allocation2 + $0x8] sm:$0xff] %v277
    $region49: #{tpu_custom_call.1} parent=1 // pred_fallthru
      _
    // Predicated region
    $region50: #{tpu_custom_call.1} parent=1 // pred_check
      %p280 = pneg %p264
    $region51: #{tpu_custom_call.1} parent=1 // pred_check_branch
      %282 = sbr.rel (%p280) target = $region53
    $region52: #{tpu_custom_call.1} parent=1 // pred_region
      %v283 = vld [vmem:[%s4] sm:$0x1]
      %v284 = vld [vmem:[%s5] sm:$0x1]
      %v285 = vld [vmem:[%s6] sm:$0x1]
      %v286 = vld [vmem:[#allocation2] sm:$0xff]
      %v287 = vld [vmem:[#allocation2 + $0x8] sm:$0xff]
      %v289 = vlaneseq
      %v290 = vshrl.u32 %v289, 7
      %v291 = vsub.s32 0, %v290
      %v292 = vrot.slane %v283, %v291
      %v294 = vadd.f32 %v286, %v292
      %v295 = vadd.f32 %v287, %v292
      %v296 = vadd.f32 %v294, %v68
      %v297 = vadd.f32 %v295, %v69
      %298 = vadd.xlane.f32.xlu0 %v296
      %v299 = vpop.xlane.xlu0 %298
      %300 = vadd.xlane.f32.xlu0 %v297
      %v301 = vpop.xlane.xlu0 %300
      %v302 = vmul.f32 %v299, 0.03125
      %v303 = vmul.f32 %v301, 0.03125
      %v304 = vsub.f32 %v296, %v302
      %v305 = vsub.f32 %v297, %v303
      %v306 = vlaneseq
      %v307 = vand.u32 %v306, 127
      %vm308 = vcmp.lt.s32.totalorder %v307, 32
      %v309 = vsel %vm308, %v304, 0.0
      %v310 = vsel %vm308, %v305, 0.0
      %v311 = vmul.f32 %v309, %v309
      %v312 = vmul.f32 %v310, %v310
      %313 = vadd.xlane.f32.xlu0 %v311
      %v314 = vpop.xlane.xlu0 %313
      %315 = vadd.xlane.f32.xlu0 %v312
      %v316 = vpop.xlane.xlu0 %315
      %v317 = vmul.f32 %v314, 0.03125
      %v318 = vmul.f32 %v316, 0.03125
      %v319 = vadd.f32 %v317, 1e-08
      %v320 = vadd.f32 %v318, 1e-08
      %v321 = vrsqrt.pop %v319
      %v322 = vrsqrt.pop %v320
      %v323 = vmul.f32 %v309, %v321
      %v324 = vmul.f32 %v310, %v322
      %v326 = vlaneseq
      %v327 = vshrl.u32 %v326, 7
      %v328 = vsub.s32 0, %v327
      %v329 = vrot.slane %v284, %v328
      %v331 = vmul.f32 %v323, %v329
      %v332 = vmul.f32 %v324, %v329
      %v334 = vlaneseq
      %v335 = vshrl.u32 %v334, 7
      %v336 = vsub.s32 0, %v335
      %v337 = vrot.slane %v285, %v336
      %v339 = vadd.f32 %v331, %v337
      %v340 = vadd.f32 %v332, %v337
      %341 = vst [vmem:[#allocation9] sm:$0xff] %v339
      %342 = vst [vmem:[#allocation9 + $0x8] sm:$0xff] %v340
    $region53: #{tpu_custom_call.1} parent=1 // pred_fallthru
      _
    // Predicated region
    $region54: #{tpu_custom_call.1} parent=1 // pred_check
      _
    $region55: #{tpu_custom_call.1} parent=1 // pred_check_branch
      %344 = sbr.rel (0) target = $region57
    $region56: #{tpu_custom_call.1} parent=1 // pred_region
      %s346 = ssub.s32 256, 256
      %347 = vsyncadd [#allocation5], %s346
      %s348 = sshll.u32 [#allocation9], 4
      %s349 = int_to_ptr.vmem [resolvable:$true] %s348
      %354 = dma.vmem_to_hbm [thread:$0]  %s349, 256, %s7, [#allocation5], 128, 128, 8
    $region57: #{tpu_custom_call.1} parent=1 // pred_fallthru
      _
    // Predicated region
    $region58: #{tpu_custom_call.1} parent=1 // pred_check
      _
    $region59: #{tpu_custom_call.1} parent=1 // pred_check_branch
      %356 = sbr.rel (0) target = $region61
    $region60: #{tpu_custom_call.1} parent=1 // pred_region
      %357 = dma.done [#allocation5], 256
    $region61: #{tpu_custom_call.1} parent=1 // pred_fallthru
      _
    %358 = vsyncpa [#allocation4], 1
    %359 = vsyncpa [#allocation7], 1
    %360 = vsyncpa [#allocation5], 1

</llo_original>
